<compile_context>
chip_gen: v7x
topology: tpu7x:2x2x1
jax: 0.10.0
libtpu: 0.0.40
codegen_flags: <defaults>
</compile_context>

<pallas_src>
import math
import functools

import jax
import jax.numpy as jnp
from jax import lax
from jax.experimental import pallas as pl
from jax.experimental.pallas import tpu as pltpu

# Hard-concrete distribution constants (standard L0-reg values).
LIMIT_A = -0.1
LIMIT_B = 1.1
EPSILON = 1e-6


# ----------------------------------------------------------------------------
# Kernels
# ----------------------------------------------------------------------------
def _l0mask_train_kernel(seed_ref, x_ref, loga_ref, o_ref, *,
                         inv_temperature, n_cols):
    """Stochastic hard-concrete gate + multiply.

    eps is drawn from a stateless per-element hash (portable: plain jnp ops
    only), keyed on (seed, global row, global col) so results are independent
    of the tiling / grid order.
    """
    bi = pl.program_id(0)
    fj = pl.program_id(1)

    x = x_ref[...]                                    # (TB, TF)
    loga = loga_ref[...]                              # (1, TF) -> broadcasts
    tb, tf = x.shape                                  # static tile sizes

    # Global element indices for this block.
    row = (lax.broadcasted_iota(jnp.int32, x.shape, 0) + bi * tb).astype(jnp.uint32)
    col = (lax.broadcasted_iota(jnp.int32, x.shape, 1) + fj * tf).astype(jnp.uint32)
    idx = row * jnp.uint32(n_cols) + col              # unique flat index

    # Mix in the seed, then murmur3-style finalizer (xor/shift/mul only).
    seed = seed_ref[0].astype(jnp.uint32)
    h = idx ^ (seed * jnp.uint32(0x9E3779B9) + jnp.uint32(0x7F4A7C15))
    h = h ^ (h >> 16)
    h = h * jnp.uint32(0x85EBCA6B)
    h = h ^ (h >> 13)
    h = h * jnp.uint32(0xC2B2AE35)
    h = h ^ (h >> 16)

    # Top 24 bits -> uniform f32 in [0, 1) (exact i32->f32 conversion).
    u = (h >> jnp.uint32(8)).astype(jnp.int32).astype(jnp.float32) * jnp.float32(
        1.0 / 16777216.0)
    eps = EPSILON + u * (1.0 - 2.0 * EPSILON)         # [eps0, 1-eps0)

    # Fused logistic noise: one log instead of two; 1/T as a multiply.
    logit_eps = jnp.log(eps / (1.0 - eps))
    y = jax.nn.sigmoid((logit_eps + loga) * inv_temperature)
    z = jnp.clip(y * (LIMIT_B - LIMIT_A) + LIMIT_A, 0.0, 1.0)   # hardtanh(., 0, 1)
    o_ref[...] = (x * z).astype(o_ref.dtype)


def _l0mask_eval_kernel(x_ref, z_ref, o_ref):
    """Deterministic gate (precomputed in the wrapper); pure streaming multiply."""
    o_ref[...] = (x_ref[...] * z_ref[...]).astype(o_ref.dtype)


# ----------------------------------------------------------------------------
# Tiling helper: biggest blocks that comfortably fit the scoped VMEM budget.
# ----------------------------------------------------------------------------
def _choose_tiles(B, F, itemsize, target_tile_bytes):
    # Feature tile: keep full F unless even an 8-row slab busts the target.
    if F * 8 * itemsize <= target_tile_bytes or F % 128 != 0:
        tile_f = F
    else:
        cap_f = max(128, (target_tile_bytes // (8 * itemsize)) // 128 * 128)
        tile_f = F
        d = cap_f
        while d >= 128:
            if F % d == 0:
                tile_f = d
                break
            d -= 128

    # Batch tile: largest multiple of 8 dividing B that fits the byte target,
    # capped so the grid keeps >= 2 steps (v7x has 2 TCs) when B allows it.
    rows_cap = max(8, target_tile_bytes // (tile_f * itemsize))
    if B % 8 != 0 or B <= 8:
        tile_b = B                      # block == full dim is always legal
    else:
        cap = min(rows_cap, max(8, B // 2))
        tile_b = 8
        d = (cap // 8) * 8
        while d >= 8:
            if B % d == 0:
                tile_b = d
                break
            d -= 8
    return tile_b, tile_f


# ----------------------------------------------------------------------------
# Wrapper
# ----------------------------------------------------------------------------
def l0mask_forward(x, qz_loga, *, temperature=2.0 / 3.0, training=True, seed=0,
                   target_tile_bytes=4 << 20):
    """x: (B, F), qz_loga: (F,). Returns x * z with hard-concrete gates z."""
    B, F = x.shape
    itemsize = jnp.dtype(x.dtype).itemsize
    tile_b, tile_f = _choose_tiles(B, F, itemsize, target_tile_bytes)
    grid = (pl.cdiv(B, tile_b), pl.cdiv(F, tile_f))
    out_shape = jax.ShapeDtypeStruct((B, F), x.dtype)
    cparams = pltpu.CompilerParams(
        dimension_semantics=("parallel", "parallel"),
        vmem_limit_bytes=32 * 1024 * 1024,
    )

    if training:
        loga2d = qz_loga.reshape(1, F).astype(jnp.float32)
        seed_arr = jnp.asarray([seed], dtype=jnp.int32)
        kernel = functools.partial(_l0mask_train_kernel,
                                   inv_temperature=float(1.0 / temperature),
                                   n_cols=int(F))
        # index_maps receive the scalar-prefetch ref as a trailing positional arg.
        x_spec = pl.BlockSpec((tile_b, tile_f), lambda i, j, s: (i, j))
        loga_spec = pl.BlockSpec((1, tile_f), lambda i, j, s: (0, j))
        out_spec = pl.BlockSpec((tile_b, tile_f), lambda i, j, s: (i, j))
        cost = pl.CostEstimate(flops=int(20 * B * F),
                               transcendentals=int(2 * B * F),
                               bytes_accessed=int((2 * B * F + F) * itemsize))
        return pl.pallas_call(
            kernel,
            out_shape=out_shape,
            grid_spec=pltpu.PrefetchScalarGridSpec(
                num_scalar_prefetch=1,
                grid=grid,
                in_specs=[x_spec, loga_spec],
                out_specs=out_spec,
            ),
            compiler_params=cparams,
            cost_estimate=cost,
        )(seed_arr, x, loga2d)
    else:
        # Deterministic gate: compute once on (F,), stream-multiply in-kernel.
        pi = jax.nn.sigmoid(qz_loga.astype(jnp.float32))
        z = jnp.clip(pi * (LIMIT_B - LIMIT_A) + LIMIT_A, 0.0, 1.0).reshape(1, F)
        z = z.astype(x.dtype)
        x_spec = pl.BlockSpec((tile_b, tile_f), lambda i, j: (i, j))
        z_spec = pl.BlockSpec((1, tile_f), lambda i, j: (0, j))
        out_spec = pl.BlockSpec((tile_b, tile_f), lambda i, j: (i, j))
        cost = pl.CostEstimate(flops=int(B * F),
                               transcendentals=0,
                               bytes_accessed=int((2 * B * F + F) * itemsize))
        return pl.pallas_call(
            _l0mask_eval_kernel,
            out_shape=out_shape,
            grid_spec=pltpu.PrefetchScalarGridSpec(
                num_scalar_prefetch=0,
                grid=grid,
                in_specs=[x_spec, z_spec],
                out_specs=out_spec,
            ),
            compiler_params=cparams,
            cost_estimate=cost,
        )(x, z)


# TODO(synk): regularization()/cdf_qz/count_expected_flops_and_l0 are tiny
# parameter-only side computations (not part of forward) and are left in
# plain JAX / untranslated.


if __name__ == "__main__":
    key = jax.random.PRNGKey(0)
    k_x, k_loga = jax.random.split(key, 2)

    B, F = 64, 256                 # batch, in_features (small demo shapes)
    droprate_init = 0.2
    temperature = 2.0 / 3.0

    # Deterministic parameter init, same distribution as reset_parameters():
    #   N(log(1 - droprate) - log(droprate), 0.01)
    loga_mean = math.log(1.0 - droprate_init) - math.log(droprate_init)
    qz_loga = loga_mean + 0.01 * jax.random.normal(k_loga, (F,), dtype=jnp.float32)
    x = jax.random.normal(k_x, (B, F), dtype=jnp.float32)

    # ---- Eval mode: deterministic, must match the plain-JAX reference exactly.
    out_eval = l0mask_forward(x, qz_loga, temperature=temperature, training=False)
    jax.block_until_ready(out_eval)
    pi = jax.nn.sigmoid(qz_loga)[None, :]
    z_ref = jnp.clip(pi * (LIMIT_B - LIMIT_A) + LIMIT_A, 0.0, 1.0)
    assert jnp.allclose(out_eval, x * z_ref, atol=1e-5, rtol=1e-5)

    # ---- Training mode: stochastic gates from the in-kernel hash RNG.
    out_train = l0mask_forward(x, qz_loga, temperature=temperature,
                               training=True, seed=1234)
    jax.block_until_ready(out_train)
    out_train2 = l0mask_forward(x, qz_loga, temperature=temperature,
                                training=True, seed=1234)
    jax.block_until_ready(out_train2)

    # Same seed -> identical gates (deterministic per-element hashing).
    assert jnp.array_equal(out_train, out_train2)
    assert bool(jnp.all(jnp.isfinite(out_train)))
    # Implied gate z = out / x must lie in [0, 1] wherever x is well away from 0.
    msk = jnp.abs(x) > 1e-3
    z_impl = jnp.where(msk, out_train / jnp.where(msk, x, 1.0), 0.5)
    assert bool(jnp.all((z_impl >= -1e-4) & (z_impl <= 1.0 + 1e-4)))

    print("KERNEL_OK")
</pallas_src>

<mosaic_0001>
module attributes {stable_mosaic.version = 11 : i64} {
  func.func @_l0mask_eval_kernel(%arg0: i32, %arg1: i32, %arg2: memref<32x256xf32, #tpu.memory_space<vmem>>, %arg3: memref<1x256xf32, #tpu.memory_space<vmem>>, %arg4: memref<32x256xf32, #tpu.memory_space<vmem>>) attributes {dimension_semantics = [#tpu.dimension_semantics<parallel>, #tpu.dimension_semantics<parallel>], iteration_bounds = array<i64: 2, 1>, scalar_prefetch = 0 : i64, scratch_operands = 0 : i64, tpu.core_type = #tpu.core_type<tc>, window_params = [{transform_indices = @transform_0, window_bounds = array<i64: 32, 256>}, {transform_indices = @transform_1, window_bounds = array<i64: 1, 256>}, {transform_indices = @transform_2, window_bounds = array<i64: 32, 256>}]} {
    %c0 = arith.constant 0 : index
    %c0_0 = arith.constant 0 : index
    %0 = vector.load %arg2[%c0, %c0_0] : memref<32x256xf32, #tpu.memory_space<vmem>>, vector<32x256xf32>
    %c0_1 = arith.constant 0 : index
    %c0_2 = arith.constant 0 : index
    %1 = vector.load %arg3[%c0_1, %c0_2] : memref<1x256xf32, #tpu.memory_space<vmem>>, vector<1x256xf32>
    %2 = vector.broadcast %1 : vector<1x256xf32> to vector<32x256xf32>
    %3 = arith.mulf %0, %2 : vector<32x256xf32>
    %c0_3 = arith.constant 0 : index
    %c0_4 = arith.constant 0 : index
    %4 = vector.load %arg4[%c0_3, %c0_4] : memref<32x256xf32, #tpu.memory_space<vmem>>, vector<32x256xf32>
    tpu.vector_store %arg4[%c0_3, %c0_4], %3 {strides = array<i32>} : memref<32x256xf32, #tpu.memory_space<vmem>>, vector<32x256xf32>,
    return
  }
  func.func @transform_0(%arg0: i32, %arg1: i32) -> (i32, i32) {
    %c0_i32 = arith.constant 0 : i32
    return %arg0, %arg1 : i32, i32
  }
  func.func @transform_1(%arg0: i32, %arg1: i32) -> (i32, i32) {
    %c0_i32 = arith.constant 0 : i32
    %c0_i32_0 = arith.constant 0 : i32
    return %c0_i32, %arg1 : i32, i32
  }
  func.func @transform_2(%arg0: i32, %arg1: i32) -> (i32, i32) {
    %c0_i32 = arith.constant 0 : i32
    return %arg0, %arg1 : i32, i32
  }
}

</mosaic_0001>

<llo_original>
// kernel: tpu_custom_call.1
$region0: #{tpu_custom_call.1}
  #allocation0 [shape = 'u32[]', space=smem, size = 0x4, offset = 0x4, fixed_abs, tag = 'smem constant byte address 0x4 - core index']
  #allocation1 [shape = 'u32[144,128]{1,0:T(1,128)}', space=vmem, size = 0x12000, scoped, tag = 'internal scratch']
  %s0 = inlined_call_operand.hbm [shape: f32[64,256], index: 0, kind: input, shape index: {}]
  %s1 = inlined_call_operand.vmem [shape: f32[1,256], index: 1, kind: input, shape index: {}]
  %s2 = inlined_call_operand.hbm [shape: f32[64,256], index: 2, kind: output, shape index: {}]
  %s3 = sld [smem:[#allocation0]]
  $region45: #{tpu_custom_call.1} parent=0
    _
  %s5 = ssub.s32 1, %s3
  %s6 = scalar_select 0, %s5, %s3
  $region1: #{tpu_custom_call.1} parent=0
    #allocation2 [shape = 'u8[65536]{0}', space=vmem, size = 0x10000, scoped, tag = 'input window, operand 0']
    #allocation3 [shape = 's32[2]{0}', space=sflag, size = 0x8, scoped, tag = 'scoped memory for tpu_custom_call.1']
    #allocation4 [shape = 's32[2]{0}', space=sflag, size = 0x8, scoped, tag = 'scoped memory for tpu_custom_call.1']
    #allocation5 [shape = 'u8[65536]{0}', space=vmem, size = 0x10000, scoped, tag = 'output window, operand 0']
    %7 = vsyncpa [#allocation3], 0
    %s8 = scalar_lea.sflag [#allocation3], 1
    %9 = vsyncpa %s8, 0
    %10 = vsyncpa [#allocation4], 0
    %s11 = scalar_lea.sflag [#allocation4], 1
    %12 = vsyncpa %s11, 0
    loop: start=0, step=1, limit=4
    $region2: #{tpu_custom_call.1} parent=1 // loop_pre_header
      _
    $region3: #{tpu_custom_call.1} parent=1 // loop_header
      %s14 = sphi 0, %s18
      %p15 = scmp.ge.s32.totalorder %s14, 4
      %s21 = sphi 0, %s33
      %s22 = sphi 0, %s29
      %s23 = sphi 0, %s21
      %s24 = sphi 0, %s22
      %s25 = sphi 0, %s23
      %s26 = sphi 0, %s24
      %s38 = sphi 0, %s40
      %s41 = sphi 0, %s38
      %s42 = sphi 0, %s41
      %s58 = sphi 0, %s42
      %s64 = sphi 0, %s66
      %s67 = sphi 0, %s64
      %s68 = sphi 0, %s67
      %s84 = sphi 0, %s68
      %s92 = sphi 0, %s94
      %s95 = sphi 0, %s92
      %s96 = sphi 0, %s95
      %s112 = sphi 0, %s96
    $region4: #{tpu_custom_call.1} parent=1 // loop_header_branch
      %17 = sbr.rel (%p15) target = $region8
    $region5: #{tpu_custom_call.1} parent=1 // loop_body
      %s19 = ssub.s32 %s14, 1
      %s20 = ssub.s32 %s14, 2
      %s27 = sadd.s32 1, %s22
      %p28 = scmp.ge.s32.totalorder %s27, 1
      %s29 = scalar_select %p28, 0, %s27
      %s30 = sadd.s32 1, %s21
      %s31 = scalar_select %p28, %s30, %s21
      %p32 = scmp.ge.s32.totalorder %s31, 2
      %s33 = scalar_select %p32, 0, %s31
      %s34 = ssub.s32 %s21, %s33
      %s35 = ssub.s32 %s22, %s29
      %s36 = sor.u32 %s34, %s35
      %p37 = scmp.eq.s32.totalorder %s36, 0
      %s39 = sadd.s32 %s38, 1
      %s40 = scalar_select %p37, %s38, %s39
      %p43 = pneg %p37
      %p44 = scmp.eq.s32.totalorder %s14, 1
      %p45 = por %p43, %p44
      %p46 = scmp.ne.s32.totalorder %s38, %s41
      %p47 = scmp.eq.s32.totalorder %s14, 0
      %p48 = por %p46, %p47
      %p49 = scmp.ne.s32.totalorder %s38, %s41
      %p50 = scmp.eq.s32.totalorder %s19, 1
      %p51 = por %p49, %p50
      %p52 = scmp.ne.s32.totalorder %s41, %s42
      %p53 = scmp.eq.s32.totalorder %s19, 0
      %p54 = por %p52, %p53
      %p55 = scmp.ne.s32.totalorder %s41, %s42
      %p56 = scmp.eq.s32.totalorder %s20, 1
      %p57 = por %p55, %p56
      %p59 = scmp.ne.s32.totalorder %s42, %s58
      %p60 = scmp.eq.s32.totalorder %s20, 0
      %p61 = por %p59, %p60
      %s62 = ssub.s32 %s22, %s29
      %p63 = scmp.eq.s32.totalorder %s62, 0
      %s65 = sadd.s32 %s64, 1
      %s66 = scalar_select %p63, %s64, %s65
      %p69 = pneg %p63
      %p70 = scmp.eq.s32.totalorder %s14, 1
      %p71 = por %p69, %p70
      %p72 = scmp.ne.s32.totalorder %s64, %s67
      %p73 = scmp.eq.s32.totalorder %s14, 0
      %p74 = por %p72, %p73
      %p75 = scmp.ne.s32.totalorder %s64, %s67
      %p76 = scmp.eq.s32.totalorder %s19, 1
      %p77 = por %p75, %p76
      %p78 = scmp.ne.s32.totalorder %s67, %s68
      %p79 = scmp.eq.s32.totalorder %s19, 0
      %p80 = por %p78, %p79
      %p81 = scmp.ne.s32.totalorder %s67, %s68
      %p82 = scmp.eq.s32.totalorder %s20, 1
      %p83 = por %p81, %p82
      %p85 = scmp.ne.s32.totalorder %s68, %s84
      %p86 = scmp.eq.s32.totalorder %s20, 0
      %p87 = por %p85, %p86
      %s88 = ssub.s32 %s21, %s33
      %s89 = ssub.s32 %s22, %s29
      %s90 = sor.u32 %s88, %s89
      %p91 = scmp.eq.s32.totalorder %s90, 0
      %s93 = sadd.s32 %s92, 1
      %s94 = scalar_select %p91, %s92, %s93
      %p97 = pneg %p91
      %p98 = scmp.eq.s32.totalorder %s14, 1
      %p99 = por %p97, %p98
      %p100 = scmp.ne.s32.totalorder %s92, %s95
      %p101 = scmp.eq.s32.totalorder %s14, 0
      %p102 = por %p100, %p101
      %p103 = scmp.ne.s32.totalorder %s92, %s95
      %p104 = scmp.eq.s32.totalorder %s19, 1
      %p105 = por %p103, %p104
      %p106 = scmp.ne.s32.totalorder %s95, %s96
      %p107 = scmp.eq.s32.totalorder %s19, 0
      %p108 = por %p106, %p107
      %p109 = scmp.ne.s32.totalorder %s95, %s96
      %p110 = scmp.eq.s32.totalorder %s20, 1
      %p111 = por %p109, %p110
      %p113 = scmp.ne.s32.totalorder %s96, %s112
      %p114 = scmp.eq.s32.totalorder %s20, 0
      %p115 = por %p113, %p114
      %p116 = scmp.le.s32.totalorder 1, %s14
      %p117 = scmp.lt.s32.totalorder %s14, 3
      %p118 = pnand %p116, %p117
      %p119 = pneg %p118
      // Predicated region
      $region9: #{tpu_custom_call.1} parent=5 // pred_check
        _
      $region10: #{tpu_custom_call.1} parent=5 // pred_check_branch
        %121 = sbr.rel (%p118) target = $region12
      $region11: #{tpu_custom_call.1} parent=5 // pred_region
        %s122 = ssub.s32 %s14, 1
        // Predicated region
        $region13: #{tpu_custom_call.1} parent=11 // pred_check
          %p123 = pneg %p80
        $region14: #{tpu_custom_call.1} parent=11 // pred_check_branch
          %125 = sbr.rel (%p123) target = $region16
        $region15: #{tpu_custom_call.1} parent=11 // pred_region
          %s126 = smul.u32 2, %s24
          %p127 = scmp.lt.s32.totalorder %s126, 1
          %s128 = scalar_select %p127, %s126, 1
          %s129 = scalar_lea.vmem %s1, %s128
          %s130 = smul.u32 2, %s24
        $region16: #{tpu_custom_call.1} parent=11 // pred_fallthru
          _
      $region12: #{tpu_custom_call.1} parent=5 // pred_fallthru
        _
      %p131 = scmp.lt.s32.totalorder %s14, 2
      // Predicated region
      $region17: #{tpu_custom_call.1} parent=5 // pred_check
        %p132 = pneg %p131
      $region18: #{tpu_custom_call.1} parent=5 // pred_check_branch
        %134 = sbr.rel (%p132) target = $region20
      $region19: #{tpu_custom_call.1} parent=5 // pred_region
        // Predicated region
        $region21: #{tpu_custom_call.1} parent=19 // pred_check
          %p135 = pneg %p48
        $region22: #{tpu_custom_call.1} parent=19 // pred_check_branch
          %137 = sbr.rel (%p135) target = $region24
        $region23: #{tpu_custom_call.1} parent=19 // pred_region
          %s138 = sand.u32 %s38, 1
          %s139 = scalar_lea.sflag [#allocation3], %s138
          %s140 = sand.u32 %s38, 1
          %s141 = smul.addr %s140, 64
          %s142 = scalar_lea.vmem [#allocation2], %s141
          %s143 = smul.u32 4, %s21
          %s144 = smul.u32 2, %s22
          %s146 = ssub.s32 1024, 1024
          %147 = vsyncadd %s139, %s146
          %s148 = smul.addr %s143, 2
          %s149 = sadd.s32 %s144, %s148
          %s150 = smul.addr %s149, 128
          %s151 = scalar_lea.hbm %s0, %s150
          %s152 = sshll.u32 %s142, 4
          %s153 = int_to_ptr.vmem [resolvable:$true] %s152
          %158 = dma.hbm_to_vmem [thread:$0]  %s151, 1024, %s153, %s139, 256, 256, 16
        $region24: #{tpu_custom_call.1} parent=19 // pred_fallthru
          _
      $region20: #{tpu_custom_call.1} parent=5 // pred_fallthru
        _
      %p159 = scmp.le.s32.totalorder 1, %s14
      %p160 = scmp.lt.s32.totalorder %s14, 3
      %p161 = pnand %p159, %p160
      %p162 = pneg %p161
      // Predicated region
      $region25: #{tpu_custom_call.1} parent=5 // pred_check
        _
      $region26: #{tpu_custom_call.1} parent=5 // pred_check_branch
        %164 = sbr.rel (%p161) target = $region28
      $region27: #{tpu_custom_call.1} parent=5 // pred_region
        %s165 = ssub.s32 %s14, 1
        %s166 = sand.u32 %s41, 1
        %s167 = scalar_lea.sflag [#allocation3], %s166
        %s168 = sand.u32 %s41, 1
        %s169 = smul.addr %s168, 64
        %s170 = scalar_lea.vmem [#allocation2], %s169
        // Predicated region
        $region29: #{tpu_custom_call.1} parent=27 // pred_check
          %p171 = pneg %p54
        $region30: #{tpu_custom_call.1} parent=27 // pred_check_branch
          %173 = sbr.rel (%p171) target = $region32
        $region31: #{tpu_custom_call.1} parent=27 // pred_region
          %174 = dma.done %s167, 1024
        $region32: #{tpu_custom_call.1} parent=27 // pred_fallthru
          _
        %s175 = sand.u32 %s41, 1
        %s176 = scalar_lea.sflag [#allocation3], %s175
        %s177 = sand.u32 %s41, 1
        %s178 = smul.addr %s177, 64
        %s179 = scalar_lea.vmem [#allocation2], %s178
        %p180 = pneg %p54
        %p181 = pneg %p51
        %s182 = smul.u32 2, %s24
        %p183 = scmp.lt.s32.totalorder %s182, 1
        %s184 = scalar_select %p183, %s182, 1
        %s185 = scalar_lea.vmem %s1, %s184
        %p186 = pneg %p80
        %p187 = pneg %p77
        %p188 = pneg %p108
        %p189 = pneg %p105
        %s190 = sand.u32 %s95, 1
        %s191 = scalar_lea.sflag [#allocation4], %s190
        %s192 = sand.u32 %s95, 1
        %s193 = smul.addr %s192, 64
        %s194 = scalar_lea.vmem [#allocation5], %s193
        %s195 = smul.u32 4, %s23
        %s196 = smul.u32 2, %s24
        %s197 = smul.u32 2, %s24
        %p198 = scmp.lt.s32.totalorder %s197, 1
        %s199 = scalar_select %p198, %s197, 1
        %s200 = scalar_lea.vmem %s1, %s199
        %s201 = smul.u32 2, %s24
        %s202 = smul.u32 4, %s23
        %s203 = smul.u32 2, %s24
        %v204 = vld [vmem:[%s170] sm:$0xff]
        %v205 = vld [vmem:[%s170 + $0x8] sm:$0xff]
        %v206 = vld [vmem:[%s170 + $0x10] sm:$0xff]
        %v207 = vld [vmem:[%s170 + $0x18] sm:$0xff]
        %v208 = vld [vmem:[%s170 + $0x20] sm:$0xff]
        %v209 = vld [vmem:[%s170 + $0x28] sm:$0xff]
        %v210 = vld [vmem:[%s170 + $0x30] sm:$0xff]
        %v211 = vld [vmem:[%s170 + $0x38] sm:$0xff]
        %v212 = vld [vmem:[%s200] sm:$0x3]
        %v214 = vlaneseq
        %v215 = vshrl.u32 %v214, 7
        %v216 = vsub.s32 0, %v215
        %v217 = vrot.slane %v212, %v216
        %v218 = vlaneseq
        %v219 = vshrl.u32 %v218, 7
        %v220 = vsub.s32 1, %v219
        %v221 = vrot.slane %v212, %v220
        %v224 = vmul.f32 %v204, %v217
        %v225 = vmul.f32 %v205, %v221
        %v226 = vmul.f32 %v206, %v217
        %v227 = vmul.f32 %v207, %v221
        %v228 = vmul.f32 %v208, %v217
        %v229 = vmul.f32 %v209, %v221
        %v230 = vmul.f32 %v210, %v217
        %v231 = vmul.f32 %v211, %v221
        %232 = vst [vmem:[%s194] sm:$0xff] %v224
        %233 = vst [vmem:[%s194 + $0x8] sm:$0xff] %v225
        %234 = vst [vmem:[%s194 + $0x10] sm:$0xff] %v226
        %235 = vst [vmem:[%s194 + $0x18] sm:$0xff] %v227
        %236 = vst [vmem:[%s194 + $0x20] sm:$0xff] %v228
        %237 = vst [vmem:[%s194 + $0x28] sm:$0xff] %v229
        %238 = vst [vmem:[%s194 + $0x30] sm:$0xff] %v230
        %239 = vst [vmem:[%s194 + $0x38] sm:$0xff] %v231
        %s240 = sand.u32 %s95, 1
        %s241 = scalar_lea.sflag [#allocation4], %s240
        %s242 = sand.u32 %s95, 1
        %s243 = smul.addr %s242, 64
        %s244 = scalar_lea.vmem [#allocation5], %s243
        // Predicated region
        $region33: #{tpu_custom_call.1} parent=27 // pred_check
          %p245 = pneg %p105
        $region34: #{tpu_custom_call.1} parent=27 // pred_check_branch
          %247 = sbr.rel (%p245) target = $region36
        $region35: #{tpu_custom_call.1} parent=27 // pred_region
          %s248 = smul.u32 4, %s23
          %s249 = smul.u32 2, %s24
          %s251 = ssub.s32 1024, 1024
          %252 = vsyncadd %s241, %s251
          %s253 = smul.addr %s248, 2
          %s254 = sadd.s32 %s249, %s253
          %s255 = smul.addr %s254, 128
          %s256 = scalar_lea.hbm %s2, %s255
          %s257 = sshll.u32 %s244, 4
          %s258 = int_to_ptr.vmem [resolvable:$true] %s257
          %263 = dma.vmem_to_hbm [thread:$0]  %s258, 1024, %s256, %s241, 256, 256, 16
        $region36: #{tpu_custom_call.1} parent=27 // pred_fallthru
          _
      $region28: #{tpu_custom_call.1} parent=5 // pred_fallthru
        _
      %p264 = scmp.le.s32.totalorder 2, %s14
      // Predicated region
      $region37: #{tpu_custom_call.1} parent=5 // pred_check
        %p265 = pneg %p264
      $region38: #{tpu_custom_call.1} parent=5 // pred_check_branch
        %267 = sbr.rel (%p265) target = $region40
      $region39: #{tpu_custom_call.1} parent=5 // pred_region
        %s268 = ssub.s32 %s14, 2
        // Predicated region
        $region41: #{tpu_custom_call.1} parent=39 // pred_check
          %p269 = pneg %p111
        $region42: #{tpu_custom_call.1} parent=39 // pred_check_branch
          %271 = sbr.rel (%p269) target = $region44
        $region43: #{tpu_custom_call.1} parent=39 // pred_region
          %s272 = sand.u32 %s96, 1
          %s273 = scalar_lea.sflag [#allocation4], %s272
          %s274 = sand.u32 %s96, 1
          %s275 = smul.addr %s274, 64
          %s276 = scalar_lea.vmem [#allocation5], %s275
          %277 = dma.done %s273, 1024
        $region44: #{tpu_custom_call.1} parent=39 // pred_fallthru
          _
      $region40: #{tpu_custom_call.1} parent=5 // pred_fallthru
        _
    $region6: #{tpu_custom_call.1} parent=1 // loop_footer
      %s18 = sadd.s32 1, %s14
    $region7: #{tpu_custom_call.1} parent=1 // loop_footer_branch
      %13 = sbr.rel target = $region3
    $region8: #{tpu_custom_call.1} parent=1 // loop_exit
      _
    %278 = vsyncpa [#allocation3], 1
    %s279 = scalar_lea.sflag [#allocation3], 1
    %280 = vsyncpa %s279, 1
    %281 = vsyncpa [#allocation4], 1
    %s282 = scalar_lea.sflag [#allocation4], 1
    %283 = vsyncpa %s282, 1

</llo_original>
